<compile_context>
chip_gen: v7x
topology: tpu7x:2x2x1
jax: 0.10.0
libtpu: 0.0.40
codegen_flags: <defaults>
</compile_context>

<pallas_src>
import functools

import jax
import jax.numpy as jnp
from jax import lax
from jax.experimental import pallas as pl
from jax.experimental.pallas import tpu as pltpu


def _betas_muscle_kernel(p3_ref, aw_ref, out_ref, *, four_p):
    # p3_ref : (3, TB, D)  planes 0/1/2 hold the x/y/z axis-angle component of part p
    #                      spread across lanes 4p..4p+3; for lanes d >= 4P plane 0
    #                      carries the raw betas value (planes 1/2 are zero there).
    # aw_ref : (M, D)      A * muscledef.weight in its native layout (grid-invariant).
    # out_ref: (TB, M, D)  betas_muscle block.
    x = p3_ref[0]                                            # (TB, D)
    y = p3_ref[1]
    z = p3_ref[2]

    # axis_angle_to_quaternion (pytorch3d semantics incl. small-angle Taylor series).
    ang2 = x * x + y * y + z * z
    ang = jnp.sqrt(ang2)
    half = 0.5 * ang
    small = ang < 1e-6
    safe = jnp.where(small, jnp.ones_like(ang), ang)
    # sin(a/2)/a; reciprocal goes to the EUP slot (free under the VPU-bound body).
    s = jnp.where(small, 0.5 - ang2 * (1.0 / 48.0),
                  jnp.sin(half) * pl.reciprocal(safe, approx=True))

    lane = lax.broadcasted_iota(jnp.int32, x.shape, 1)       # output lane index d
    comp = lane & 3                                          # d % 4 (quat component)
    q = jnp.where(comp == 0, jnp.cos(half),
        jnp.where(comp == 1, x * s,
        jnp.where(comp == 2, y * s, z * s)))
    # Pose lanes take the quaternion component; betas lanes pass plane 0 through.
    tensor_b = jnp.where(lane < four_p, q, x)                # (TB, D)

    # betas_muscle[b, m, d] = AW[m, d] * tensor_b[b, d]
    out_ref[...] = aw_ref[...][None, :, :] * tensor_b[:, None, :]


def betas_muscle_predictor_pallas(pose_rows, betas_rows, AW, num_parts, num_muscle, S):
    """Pallas implementation of BetasMusclePredictor.forward on gathered rows."""
    B = pose_rows.shape[0]
    P = num_parts
    M = num_muscle
    D = 4 * P + S

    # --- wrapper-side layout plumbing (tiny arrays, pure XLA) ---
    aa = pose_rows[:, 3:].reshape(B, P, 3).astype(jnp.float32)   # drop global rotation
    comp_planes = jnp.transpose(aa, (2, 0, 1))                   # (3, B, P)
    spread = jnp.repeat(comp_planes, 4, axis=2)                  # (3, B, 4P): [.,.,4p+k] = comp[.,.,p]
    if S > 0:
        bet = betas_rows[:, :S].astype(jnp.float32)              # (B, S)
        tail = jnp.concatenate(
            [bet[None], jnp.zeros((2, B, S), jnp.float32)], axis=0)  # (3, B, S)
        p3 = jnp.concatenate([spread, tail], axis=2)             # (3, B, D)
    else:
        p3 = spread
    AW = AW.astype(jnp.float32)

    # Batch tile: the whole batch in one grid step for the common (small-ids) case;
    # large B is padded up to a multiple of TB so every block keeps an aligned
    # second-to-last dim and blocks stay comfortably inside VMEM.
    if B <= 256:
        TB, Bp = B, B
    else:
        TB = 256
        Bp = ((B + TB - 1) // TB) * TB
        if Bp != B:
            p3 = jnp.pad(p3, ((0, 0), (0, Bp - B), (0, 0)))
    grid = (Bp // TB,)

    out = pl.pallas_call(
        functools.partial(_betas_muscle_kernel, four_p=4 * P),
        out_shape=jax.ShapeDtypeStruct((Bp, M, D), jnp.float32),
        grid_spec=pltpu.PrefetchScalarGridSpec(
            num_scalar_prefetch=0,
            grid=grid,
            in_specs=[
                pl.BlockSpec((3, TB, D), lambda i: (0, i, 0)),   # merged pose/betas planes
                pl.BlockSpec((M, D), lambda i: (0, 0)),          # A*W, grid-invariant (stays resident)
            ],
            out_specs=pl.BlockSpec((TB, M, D), lambda i: (i, 0, 0)),
        ),
        compiler_params=pltpu.CompilerParams(
            dimension_semantics=("parallel",)),                  # v7x: shard batch over both TCs
    )(p3, AW)

    if Bp != B:
        out = out[:B]
    return out, AW


def horse_net_forward(params, ids):
    """HorseNet.forward(ids). Returns (betas_muscle, A*W)."""
    pose = params["pose"][ids, :]     # tiny XLA row gathers
    betas = params["betas"][ids, :]
    trans = params["trans"][ids, :]   # only the SMAL vertex pass consumes trans
    del trans
    b_muscle, A = betas_muscle_predictor_pallas(
        pose, betas, params["AW"],
        params["num_parts"], params["num_muscle"], params["S"])
    # TODO(synk): SMAL(betas, theta=pose, trans, betas_muscle) -> (verts, pose_dv)
    # needs the SMAL body-model class and its pickled template data (not provided).
    return b_muscle, A


# ---------------- pure-JAX reference for correctness check ----------------
def ref_betas_muscle(pose_b, betas_b, AW, P, S):
    aa = pose_b[:, 3:].reshape(-1, P, 3)
    angles = jnp.sqrt(jnp.sum(aa * aa, axis=-1, keepdims=True))
    half = 0.5 * angles
    small = jnp.abs(angles) < 1e-6
    s = jnp.where(small, 0.5 - angles * angles / 48.0,
                  jnp.sin(half) / jnp.where(small, 1.0, angles))
    quat = jnp.concatenate([jnp.cos(half), aa * s], axis=-1).reshape(aa.shape[0], 4 * P)
    tb = jnp.concatenate([quat, betas_b[:, :S]], axis=1)
    return tb[:, None, :] * AW[None, :, :]


if __name__ == "__main__":
    key = jax.random.PRNGKey(0)
    kA, kW, kpose, kbetas, ktrans = jax.random.split(key, 5)

    N = 4               # number of registered horses (rows of self.pose/betas/trans)
    num_parts = 8       # nJ - 1
    num_muscle = 16
    S = 4               # opts.shape_betas_for_muscles
    num_betas = 8
    D = 4 * num_parts + S

    # --- deterministic parameter init (mirrors BetasMusclePredictor.__init__) ---
    A_raw = jax.random.normal(kA, (num_parts, num_muscle), jnp.float32)      # A from SMAL
    W = 0.001 * jax.random.normal(kW, (num_muscle, D), jnp.float32)          # muscledef.weight
    A_here = jnp.concatenate(
        [jnp.repeat(A_raw.T, 4, axis=1),                                     # A_here[:,4p+k]=A[p,:]
         jnp.ones((num_muscle, S), jnp.float32)],                            # A_here[:,4P:]=1
        axis=1)
    AW = A_here * W                                                          # A * muscledef.weight

    pose = 0.5 * jax.random.normal(kpose, (N, 3 + 3 * num_parts), jnp.float32)
    betas = jax.random.normal(kbetas, (N, num_betas), jnp.float32)
    trans = jax.random.normal(ktrans, (N, 3), jnp.float32)

    params = dict(pose=pose, betas=betas, trans=trans, AW=AW,
                  num_parts=num_parts, num_muscle=num_muscle, S=S)
    ids = jnp.array([1, 3], dtype=jnp.int32)

    b_muscle, A_out = horse_net_forward(params, ids)
    b_muscle = jax.block_until_ready(b_muscle)
    A_out = jax.block_until_ready(A_out)

    ref = ref_betas_muscle(pose[ids], betas[ids], AW, num_parts, S)
    assert b_muscle.shape == (ids.shape[0], num_muscle, D)
    # tolerance slightly loosened to accommodate pl.reciprocal(approx=True) on the EUP
    assert jnp.allclose(b_muscle, ref, atol=1e-5, rtol=5e-3), "kernel != reference"
    assert jnp.allclose(A_out, AW), "returned A*W mismatch"
    print("KERNEL_OK")
</pallas_src>

<mosaic_0001>
module attributes {stable_mosaic.version = 11 : i64} {
  func.func @_betas_muscle_kernel(%arg0: i32, %arg1: memref<3x2x36xf32, #tpu.memory_space<vmem>>, %arg2: memref<16x36xf32, #tpu.memory_space<vmem>>, %arg3: memref<2x16x36xf32, #tpu.memory_space<vmem>>) attributes {dimension_semantics = [#tpu.dimension_semantics<parallel>], iteration_bounds = array<i64: 1>, scalar_prefetch = 0 : i64, scratch_operands = 0 : i64, tpu.core_type = #tpu.core_type<tc>, window_params = [{transform_indices = @transform_0, window_bounds = array<i64: 3, 2, 36>}, {pipeline_mode = #tpu.pipeline_mode<synchronous>, transform_indices = @transform_1, window_bounds = array<i64: 16, 36>}, {transform_indices = @transform_2, window_bounds = array<i64: 2, 16, 36>}]} {
    %c0 = arith.constant 0 : index
    %c0_0 = arith.constant 0 : index
    %c0_1 = arith.constant 0 : index
    %0 = vector.load %arg1[%c0, %c0_0, %c0_1] : memref<3x2x36xf32, #tpu.memory_space<vmem>>, vector<1x2x36xf32>
    %1 = vector.shape_cast %0 : vector<1x2x36xf32> to vector<2x36xf32>
    %c1 = arith.constant 1 : index
    %c0_2 = arith.constant 0 : index
    %c0_3 = arith.constant 0 : index
    %2 = vector.load %arg1[%c1, %c0_2, %c0_3] : memref<3x2x36xf32, #tpu.memory_space<vmem>>, vector<1x2x36xf32>
    %3 = vector.shape_cast %2 : vector<1x2x36xf32> to vector<2x36xf32>
    %c2 = arith.constant 2 : index
    %c0_4 = arith.constant 0 : index
    %c0_5 = arith.constant 0 : index
    %4 = vector.load %arg1[%c2, %c0_4, %c0_5] : memref<3x2x36xf32, #tpu.memory_space<vmem>>, vector<1x2x36xf32>
    %5 = vector.shape_cast %4 : vector<1x2x36xf32> to vector<2x36xf32>
    %6 = arith.mulf %1, %1 : vector<2x36xf32>
    %7 = arith.mulf %3, %3 : vector<2x36xf32>
    %8 = arith.addf %6, %7 : vector<2x36xf32>
    %9 = arith.mulf %5, %5 : vector<2x36xf32>
    %10 = arith.addf %8, %9 : vector<2x36xf32>
    %11 = math.sqrt %10 : vector<2x36xf32>
    %cst = arith.constant 5.000000e-01 : f32
    %12 = vector.broadcast %cst : f32 to vector<2x36xf32>
    %13 = arith.mulf %12, %11 : vector<2x36xf32>
    %cst_6 = arith.constant 9.99999997E-7 : f32
    %14 = vector.broadcast %cst_6 : f32 to vector<2x36xf32>
    %15 = arith.cmpf olt, %11, %14 : vector<2x36xf32>
    %cst_7 = arith.constant 1.000000e+00 : f32
    %16 = vector.broadcast %cst_7 : f32 to vector<2x36xf32>
    %17 = arith.select %15, %16, %11 : vector<2x36xi1>, vector<2x36xf32>
    %cst_8 = arith.constant 0.020833334 : f32
    %18 = vector.broadcast %cst_8 : f32 to vector<2x36xf32>
    %19 = arith.mulf %10, %18 : vector<2x36xf32>
    %cst_9 = arith.constant 5.000000e-01 : f32
    %20 = vector.broadcast %cst_9 : f32 to vector<2x36xf32>
    %21 = arith.subf %20, %19 : vector<2x36xf32>
    %22 = math.sin %13 : vector<2x36xf32>
    %23 = tpu.reciprocal %17 {approx = true} : vector<2x36xf32> -> vector<2x36xf32>
    %24 = arith.mulf %22, %23 : vector<2x36xf32>
    %25 = arith.select %15, %21, %24 : vector<2x36xi1>, vector<2x36xf32>
    %26 = tpu.iota {dimensions = array<i32: 1>} : vector<2x36xi32>
    %c3_i32 = arith.constant 3 : i32
    %27 = vector.broadcast %c3_i32 : i32 to vector<2x36xi32>
    %28 = arith.andi %26, %27 : vector<2x36xi32>
    %c0_i32 = arith.constant 0 : i32
    %29 = vector.broadcast %c0_i32 : i32 to vector<2x36xi32>
    %30 = arith.cmpi eq, %28, %29 : vector<2x36xi32>
    %31 = math.cos %13 : vector<2x36xf32>
    %c1_i32 = arith.constant 1 : i32
    %32 = vector.broadcast %c1_i32 : i32 to vector<2x36xi32>
    %33 = arith.cmpi eq, %28, %32 : vector<2x36xi32>
    %34 = arith.mulf %1, %25 : vector<2x36xf32>
    %c2_i32 = arith.constant 2 : i32
    %35 = vector.broadcast %c2_i32 : i32 to vector<2x36xi32>
    %36 = arith.cmpi eq, %28, %35 : vector<2x36xi32>
    %37 = arith.mulf %3, %25 : vector<2x36xf32>
    %38 = arith.mulf %5, %25 : vector<2x36xf32>
    %39 = arith.select %36, %37, %38 : vector<2x36xi1>, vector<2x36xf32>
    %40 = arith.select %33, %34, %39 : vector<2x36xi1>, vector<2x36xf32>
    %41 = arith.select %30, %31, %40 : vector<2x36xi1>, vector<2x36xf32>
    %c32_i32 = arith.constant 32 : i32
    %42 = vector.broadcast %c32_i32 : i32 to vector<2x36xi32>
    %43 = arith.cmpi slt, %26, %42 : vector<2x36xi32>
    %44 = arith.select %43, %41, %1 : vector<2x36xi1>, vector<2x36xf32>
    %c0_10 = arith.constant 0 : index
    %c0_11 = arith.constant 0 : index
    %45 = vector.load %arg2[%c0_10, %c0_11] : memref<16x36xf32, #tpu.memory_space<vmem>>, vector<16x36xf32>
    %46 = vector.shape_cast %45 : vector<16x36xf32> to vector<1x16x36xf32>
    %47 = vector.shape_cast %44 : vector<2x36xf32> to vector<2x1x36xf32>
    %48 = vector.broadcast %46 : vector<1x16x36xf32> to vector<2x16x36xf32>
    %49 = vector.broadcast %47 : vector<2x1x36xf32> to vector<2x16x36xf32>
    %50 = arith.mulf %48, %49 : vector<2x16x36xf32>
    %c0_12 = arith.constant 0 : index
    %c0_13 = arith.constant 0 : index
    %c0_14 = arith.constant 0 : index
    %51 = vector.load %arg3[%c0_12, %c0_13, %c0_14] : memref<2x16x36xf32, #tpu.memory_space<vmem>>, vector<2x16x36xf32>
    tpu.vector_store %arg3[%c0_12, %c0_13, %c0_14], %50 {strides = array<i32>} : memref<2x16x36xf32, #tpu.memory_space<vmem>>, vector<2x16x36xf32>,
    return
  }
  func.func @transform_0(%arg0: i32) -> (i32, i32, i32) {
    %c0_i32 = arith.constant 0 : i32
    %c0_i32_0 = arith.constant 0 : i32
    %c0_i32_1 = arith.constant 0 : i32
    return %c0_i32, %arg0, %c0_i32_0 : i32, i32, i32
  }
  func.func @transform_1(%arg0: i32) -> (i32, i32) {
    %c0_i32 = arith.constant 0 : i32
    %c0_i32_0 = arith.constant 0 : i32
    %c0_i32_1 = arith.constant 0 : i32
    return %c0_i32, %c0_i32_0 : i32, i32
  }
  func.func @transform_2(%arg0: i32) -> (i32, i32, i32) {
    %c0_i32 = arith.constant 0 : i32
    %c0_i32_0 = arith.constant 0 : i32
    %c0_i32_1 = arith.constant 0 : i32
    return %arg0, %c0_i32, %c0_i32_0 : i32, i32, i32
  }
}

</mosaic_0001>

<llo_original>
// kernel: tpu_custom_call.1
$region0: #{tpu_custom_call.1}
  #allocation0 [shape = 'u32[]', space=smem, size = 0x4, offset = 0x4, fixed_abs, tag = 'smem constant byte address 0x4 - core index']
  #allocation1 [shape = 'u32[144,128]{1,0:T(1,128)}', space=vmem, size = 0x12000, scoped, tag = 'internal scratch']
  %s0 = inlined_call_operand.hbm [shape: f32[3,2,36], index: 0, kind: input, shape index: {}]
  %s1 = inlined_call_operand.hbm [shape: f32[16,36], index: 1, kind: input, shape index: {}]
  %s2 = inlined_call_operand.hbm [shape: f32[2,16,36], index: 2, kind: output, shape index: {}]
  %s3 = sld [smem:[#allocation0]]
  $region26: #{tpu_custom_call.1} parent=0
    _
  %s5 = ssub.s32 1, %s3
  %s6 = scalar_select 0, %s5, %s3
  $region1: #{tpu_custom_call.1} parent=0
    #allocation2 [shape = 'u8[3072]{0}', space=vmem, size = 0xc00, scoped, tag = 'input window, operand 0, single buffered']
    #allocation3 [shape = 's32[1]{0}', space=sflag, size = 0x4, scoped, tag = 'scoped memory for tpu_custom_call.1']
    #allocation4 [shape = 's32[1]{0}', space=sflag, size = 0x4, scoped, tag = 'scoped memory for tpu_custom_call.1']
    #allocation5 [shape = 'u8[8192]{0}', space=vmem, size = 0x2000, scoped, tag = 'input window, operand 1, single buffered']
    #allocation6 [shape = 's32[1]{0}', space=sflag, size = 0x4, scoped, tag = 'scoped memory for tpu_custom_call.1']
    #allocation7 [shape = 'u8[16384]{0}', space=vmem, size = 0x4000, scoped, tag = 'output window, operand 0, single buffered']
    %7 = vsyncpa [#allocation3], 0
    %8 = vsyncpa [#allocation6], 0
    %9 = vsyncpa [#allocation4], 0
    // Predicated region
    $region2: #{tpu_custom_call.1} parent=1 // pred_check
      _
    $region3: #{tpu_custom_call.1} parent=1 // pred_check_branch
      %11 = sbr.rel (0) target = $region5
    $region4: #{tpu_custom_call.1} parent=1 // pred_region
      %s13 = ssub.s32 96, 96
      %14 = vsyncadd [#allocation3], %s13
      %s15 = sshll.u32 [#allocation2], 4
      %s16 = int_to_ptr.vmem [resolvable:$true] %s15
      %21 = dma.hbm_to_vmem [thread:$0]  %s0, 96, %s16, [#allocation3], 32, 32, 2
    $region5: #{tpu_custom_call.1} parent=1 // pred_fallthru
      _
    // Predicated region
    $region6: #{tpu_custom_call.1} parent=1 // pred_check
      _
    $region7: #{tpu_custom_call.1} parent=1 // pred_check_branch
      %23 = sbr.rel (0) target = $region9
    $region8: #{tpu_custom_call.1} parent=1 // pred_region
      %s25 = ssub.s32 256, 256
      %26 = vsyncadd [#allocation6], %s25
      %s27 = sshll.u32 [#allocation5], 4
      %s28 = int_to_ptr.vmem [resolvable:$true] %s27
      %33 = dma.hbm_to_vmem [thread:$0]  %s1, 256, %s28, [#allocation6], 128, 128, 8
    $region9: #{tpu_custom_call.1} parent=1 // pred_fallthru
      _
    // Predicated region
    $region10: #{tpu_custom_call.1} parent=1 // pred_check
      _
    $region11: #{tpu_custom_call.1} parent=1 // pred_check_branch
      %35 = sbr.rel (0) target = $region13
    $region12: #{tpu_custom_call.1} parent=1 // pred_region
      %36 = dma.done [#allocation3], 96
    $region13: #{tpu_custom_call.1} parent=1 // pred_fallthru
      _
    // Predicated region
    $region14: #{tpu_custom_call.1} parent=1 // pred_check
      _
    $region15: #{tpu_custom_call.1} parent=1 // pred_check_branch
      %38 = sbr.rel (0) target = $region17
    $region16: #{tpu_custom_call.1} parent=1 // pred_region
      %39 = dma.done [#allocation6], 256
    $region17: #{tpu_custom_call.1} parent=1 // pred_fallthru
      _
    %v40 = vld [vmem:[#allocation2] sm:$0x3]
    %s41 = scalar_lea.vmem [#allocation2], 2
    %v42 = vld [vmem:[%s41] sm:$0x3]
    %s43 = scalar_lea.vmem [#allocation2], 4
    %v44 = vld [vmem:[%s43] sm:$0x3]
    %v45 = vmul.f32 %v40, %v40
    %v46 = vmul.f32 %v42, %v42
    %v47 = vadd.f32 %v45, %v46
    %v48 = vmul.f32 %v44, %v44
    %v49 = vadd.f32 %v47, %v48
    %v50 = vrsqrt.pop %v49
    %v51 = vmul.f32 %v49, %v50
    %vm52 = vcmp.eq.f32.partialorder %v49, inf
    %v53 = vsel %vm52, %v49, %v51
    %vm54 = vcmp.eq.f32.partialorder %v49, 0.0
    %v55 = vand.u32 %v49, 2147483648
    %v56 = vsel %vm54, %v55, %v53
    %v57 = vmul.f32 %v56, 0.5
    %vm58 = vcmp.lt.f32.partialorder %v56, 1e-06
    %v59 = vsel %vm58, 1.0, %v56
    %v60 = vmul.f32 %v49, 0.020833334
    %v61 = vsub.f32 0.5, %v60
    %v62 = vand.u32 2147483647, %v57
    %vm63 = vcmp.le.f32.partialorder %v62, 0.7853982
    %vm64 = vcmp.lt.s32.totalorder %v57, 0
    %v65 = vand.u32 %v57, 2139095040
    %v66 = vshrl.u32 %v65, 23
    %v67 = vsub.s32 %v66, 127
    %v68 = vand.u32 2147483647, %v57
    %v69 = vand.u32 %v68, 8388607
    %v70 = vor.u32 %v69, 8388608
    %v71 = vsub.s32 0, %v70
    %v72 = vadd.s32 %v67, 1
    %vm73 = vcmp.gt.s32.totalorder %v72, 0
    %v74 = vsel %vm73, %v72, 0
    %v75 = vshrl.u32 %v74, 5
    %v76 = vand.u32 %v74, 31
    %v77 = vsub.s32 32, %v76
    %v78 = vshrl.u32 683565275, %v77
    %v79 = vshll.u32 683565275, %v76
    %v80 = vshrl.u32 2475754826, %v77
    %v81 = vor.u32 %v79, %v80
    %v82 = vshll.u32 2475754826, %v76
    %v83 = vshrl.u32 2131351028, %v77
    %v84 = vor.u32 %v82, %v83
    %v85 = vshll.u32 2131351028, %v76
    %v86 = vshrl.u32 2102212464, %v77
    %v87 = vor.u32 %v85, %v86
    %v88 = vshll.u32 2102212464, %v76
    %v89 = vshrl.u32 920167782, %v77
    %v90 = vor.u32 %v88, %v89
    %v91 = vshll.u32 920167782, %v76
    %v92 = vshrl.u32 1326507024, %v77
    %v93 = vor.u32 %v91, %v92
    %vm94 = vcmp.lt.s32.totalorder %v75, 1
    %vm95 = vcmp.lt.s32.totalorder %v75, 2
    %vm96 = vcmp.lt.s32.totalorder %v75, 3
    %vm97 = vcmp.lt.s32.totalorder %v75, 4
    %v98 = vsel %vm94, %v78, %v81
    %v99 = vsel %vm97, %v87, 2102212464
    %v100 = vsel %vm96, %v84, %v99
    %v101 = vsel %vm95, %v98, %v100
    %v102 = vsel %vm94, %v81, %v84
    %v103 = vsel %vm97, %v90, 920167782
    %v104 = vsel %vm96, %v87, %v103
    %v105 = vsel %vm95, %v102, %v104
    %v106 = vsel %vm94, %v84, %v87
    %v107 = vsel %vm97, %v93, 1326507024
    %v108 = vsel %vm96, %v90, %v107
    %v109 = vsel %vm95, %v106, %v108
    %v110 = vshll.u32 %v70, 8
    %v111 = vmul.u32.u64.compose %v110, %v109
    %v112 = vextract.low.u32 %v111
    %v113 = vextract.high.u32 %v111
    %v114 = vmul.u32.u64.compose %v110, %v105
    %v115 = vextract.low.u32 %v114
    %v116 = vextract.high.u32 %v114
    %v117 = vmul.u32 %v110, %v101
    %v118 = vadd.s32 %v113, %v115
    %vm119 = vc.u32 %v113, %v115
    %v120 = vadd.s32 %v116, 1
    %v121 = vsel %vm119, %v120, %v116
    %v122 = vadd.s32 %v117, %v121
    %v123 = vadd.s32 %v122, 536870912
    %v124 = vshrl.u32 %v123, 30
    %v125 = vshll.u32 %v124, 30
    %v126 = vsub.s32 %v122, %v125
    %vm127 = vcmp.lt.s32.totalorder %v126, 0
    %v128 = vsub.s32 0, %v126
    %v129 = vsel %vm127, %v128, %v126
    %v130 = vclz %v129
    %v131 = vsub.s32 %v130, 2
    %vm132 = vcmp.gt.s32.totalorder 0, %v131
    %v133 = vsel %vm132, 0, %v131
    %v134 = vsub.s32 32, %v133
    %v135 = vshll.u32 %v126, %v133
    %v136 = vshrl.u32 %v118, %v134
    %v137 = vor.u32 %v135, %v136
    %v138 = vsub.s32 4294967266, %v133
    %v139 = vadd.s32 %v138, 127
    %v140 = vshll.u32 %v139, 23
    %v141 = vor.u32 4788187, %v140
    %v142 = vand.u32 2147483647, %v141
    %v144 = vcvt.s32.f32 %v137
    %v145 = vmul.f32 %v144, %v142
    %v146 = vxor.u32 %v145, 2147483648
    %v147 = vsel %vm64, %v146, %v145
    %v148 = vsub.s32 4, %v124
    %v149 = vsel %vm64, %v148, %v124
    %v150 = vsel %vm63, %v57, %v147
    %v151 = vsel %vm63, 0, %v149
    %v152 = vcosq.f32.pop %v150
    %v153 = vsinq.f32.pop %v150
    %vm154 = vweird.f32 %v57
    %v155 = vadd.s32 %v151, 3
    %v156 = vand.u32 %v155, 3
    %vm157 = vcmp.lt.s32.totalorder %v156, 2
    %vm158 = vcmp.eq.s32.totalorder %v156, 0
    %v159 = vxor.u32 %v153, 2147483648
    %v160 = vsel %vm158, %v152, %v159
    %vm161 = vcmp.eq.s32.totalorder %v156, 2
    %v162 = vxor.u32 %v152, 2147483648
    %v163 = vsel %vm161, %v162, %v153
    %v164 = vsel %vm157, %v160, %v163
    %v165 = vsel %vm154, nan, %v164
    %v166 = vrcp.pop %v59
    %v167 = vmul.f32 %v165, %v166
    %v168 = vsel %vm58, %v61, %v167
    %v169 = vlaneseq
    %v170 = vand.u32 %v169, 127
    %v171 = vand.u32 %v170, 3
    %vm172 = vcmp.eq.s32.totalorder %v171, 0
    %v173 = vand.u32 2147483647, %v57
    %vm174 = vcmp.le.f32.partialorder %v173, 0.7853982
    %vm175 = vcmp.lt.s32.totalorder %v57, 0
    %v176 = vand.u32 %v57, 2139095040
    %v177 = vshrl.u32 %v176, 23
    %v178 = vsub.s32 %v177, 127
    %v179 = vand.u32 2147483647, %v57
    %v180 = vand.u32 %v179, 8388607
    %v181 = vor.u32 %v180, 8388608
    %v182 = vsub.s32 0, %v181
    %v183 = vadd.s32 %v178, 1
    %vm184 = vcmp.gt.s32.totalorder %v183, 0
    %v185 = vsel %vm184, %v183, 0
    %v186 = vshrl.u32 %v185, 5
    %v187 = vand.u32 %v185, 31
    %v188 = vsub.s32 32, %v187
    %v189 = vshrl.u32 683565275, %v188
    %v190 = vshll.u32 683565275, %v187
    %v191 = vshrl.u32 2475754826, %v188
    %v192 = vor.u32 %v190, %v191
    %v193 = vshll.u32 2475754826, %v187
    %v194 = vshrl.u32 2131351028, %v188
    %v195 = vor.u32 %v193, %v194
    %v196 = vshll.u32 2131351028, %v187
    %v197 = vshrl.u32 2102212464, %v188
    %v198 = vor.u32 %v196, %v197
    %v199 = vshll.u32 2102212464, %v187
    %v200 = vshrl.u32 920167782, %v188
    %v201 = vor.u32 %v199, %v200
    %v202 = vshll.u32 920167782, %v187
    %v203 = vshrl.u32 1326507024, %v188
    %v204 = vor.u32 %v202, %v203
    %vm205 = vcmp.lt.s32.totalorder %v186, 1
    %vm206 = vcmp.lt.s32.totalorder %v186, 2
    %vm207 = vcmp.lt.s32.totalorder %v186, 3
    %vm208 = vcmp.lt.s32.totalorder %v186, 4
    %v209 = vsel %vm205, %v189, %v192
    %v210 = vsel %vm208, %v198, 2102212464
    %v211 = vsel %vm207, %v195, %v210
    %v212 = vsel %vm206, %v209, %v211
    %v213 = vsel %vm205, %v192, %v195
    %v214 = vsel %vm208, %v201, 920167782
    %v215 = vsel %vm207, %v198, %v214
    %v216 = vsel %vm206, %v213, %v215
    %v217 = vsel %vm205, %v195, %v198
    %v218 = vsel %vm208, %v204, 1326507024
    %v219 = vsel %vm207, %v201, %v218
    %v220 = vsel %vm206, %v217, %v219
    %v221 = vshll.u32 %v181, 8
    %v222 = vmul.u32.u64.compose %v221, %v220
    %v223 = vextract.low.u32 %v222
    %v224 = vextract.high.u32 %v222
    %v225 = vmul.u32.u64.compose %v221, %v216
    %v226 = vextract.low.u32 %v225
    %v227 = vextract.high.u32 %v225
    %v228 = vmul.u32 %v221, %v212
    %v229 = vadd.s32 %v224, %v226
    %vm230 = vc.u32 %v224, %v226
    %v231 = vadd.s32 %v227, 1
    %v232 = vsel %vm230, %v231, %v227
    %v233 = vadd.s32 %v228, %v232
    %v234 = vadd.s32 %v233, 536870912
    %v235 = vshrl.u32 %v234, 30
    %v236 = vshll.u32 %v235, 30
    %v237 = vsub.s32 %v233, %v236
    %vm238 = vcmp.lt.s32.totalorder %v237, 0
    %v239 = vsub.s32 0, %v237
    %v240 = vsel %vm238, %v239, %v237
    %v241 = vclz %v240
    %v242 = vsub.s32 %v241, 2
    %vm243 = vcmp.gt.s32.totalorder 0, %v242
    %v244 = vsel %vm243, 0, %v242
    %v245 = vsub.s32 32, %v244
    %v246 = vshll.u32 %v237, %v244
    %v247 = vshrl.u32 %v229, %v245
    %v248 = vor.u32 %v246, %v247
    %v249 = vsub.s32 4294967266, %v244
    %v250 = vadd.s32 %v249, 127
    %v251 = vshll.u32 %v250, 23
    %v252 = vor.u32 4788187, %v251
    %v253 = vand.u32 2147483647, %v252
    %v255 = vcvt.s32.f32 %v248
    %v256 = vmul.f32 %v255, %v253
    %v257 = vxor.u32 %v256, 2147483648
    %v258 = vsel %vm175, %v257, %v256
    %v259 = vsub.s32 4, %v235
    %v260 = vsel %vm175, %v259, %v235
    %v261 = vsel %vm174, %v57, %v258
    %v262 = vsel %vm174, 0, %v260
    %v263 = vcosq.f32.pop %v261
    %v264 = vsinq.f32.pop %v261
    %vm265 = vweird.f32 %v57
    %v266 = vand.u32 %v262, 3
    %vm267 = vcmp.lt.s32.totalorder %v266, 2
    %vm268 = vcmp.eq.s32.totalorder %v266, 0
    %v269 = vxor.u32 %v264, 2147483648
    %v270 = vsel %vm268, %v263, %v269
    %vm271 = vcmp.eq.s32.totalorder %v266, 2
    %v272 = vxor.u32 %v263, 2147483648
    %v273 = vsel %vm271, %v272, %v264
    %v274 = vsel %vm267, %v270, %v273
    %v275 = vsel %vm265, nan, %v274
    %vm276 = vcmp.eq.s32.totalorder %v171, 1
    %v277 = vmul.f32 %v40, %v168
    %vm278 = vcmp.eq.s32.totalorder %v171, 2
    %v279 = vmul.f32 %v42, %v168
    %v280 = vmul.f32 %v44, %v168
    %v281 = vsel %vm278, %v279, %v280
    %v282 = vsel %vm276, %v277, %v281
    %v283 = vsel %vm172, %v275, %v282
    %vm284 = vcmp.lt.s32.totalorder %v170, 32
    %v285 = vsel %vm284, %v283, %v40
    %v286 = vld [vmem:[#allocation5] sm:$0xff]
    %v287 = vld [vmem:[#allocation5 + $0x8] sm:$0xff]
    %v290 = vunpack.c.l.s4 1966171168
    %v291 = vunpack.c.0.s8 %v290
    %v292 = vlaneseq
    %v293 = vshrl.u32 %v292, 7
    %v294 = vsub.s32 %v291, %v293
    %v295 = vrot.slane %v285, %v294
    %v296 = vcombine.high %v295, %v295
    %v298 = vunpack.c.l.s4 1966171168
    %v299 = vunpack.c.0.s8 %v298
    %v300 = vlaneseq
    %v301 = vshrl.u32 %v300, 7
    %v302 = vsub.s32 %v299, %v301
    %v303 = vrot.slane %v295, %v302
    %v305 = vunpack.c.l.s4 1966171168
    %v306 = vunpack.c.0.s8 %v305
    %v307 = vlaneseq
    %v308 = vshrl.u32 %v307, 7
    %v309 = vsub.s32 %v306, %v308
    %v310 = vrot.slane %v296, %v309
    %v311 = vlaneseq
    %v312 = vshrl.u32 %v311, 7
    %v313 = vsub.s32 0, %v312
    %v314 = vrot.slane %v303, %v313
    %v315 = vlaneseq
    %v316 = vshrl.u32 %v315, 7
    %v317 = vsub.s32 0, %v316
    %v318 = vrot.slane %v310, %v317
    %v321 = vmul.f32 %v286, %v314
    %v322 = vmul.f32 %v287, %v314
    %v323 = vmul.f32 %v286, %v318
    %v324 = vmul.f32 %v287, %v318
    %vm325 = vcmask 293888
    %326 = vst.msk [vmem:[#allocation7] sm:$0xff] %vm325, %v321
    %327 = vst.msk [vmem:[#allocation7 + $0x8] sm:$0xff] %vm325, %v322
    %328 = vst.msk [vmem:[#allocation7 + $0x10] sm:$0xff] %vm325, %v323
    %329 = vst.msk [vmem:[#allocation7 + $0x18] sm:$0xff] %vm325, %v324
    // Predicated region
    $region18: #{tpu_custom_call.1} parent=1 // pred_check
      _
    $region19: #{tpu_custom_call.1} parent=1 // pred_check_branch
      %331 = sbr.rel (0) target = $region21
    $region20: #{tpu_custom_call.1} parent=1 // pred_region
      %s333 = ssub.s32 512, 512
      %334 = vsyncadd [#allocation4], %s333
      %s335 = sshll.u32 [#allocation7], 4
      %s336 = int_to_ptr.vmem [resolvable:$true] %s335
      %341 = dma.vmem_to_hbm [thread:$0]  %s336, 512, %s2, [#allocation4], 128, 128, 8
    $region21: #{tpu_custom_call.1} parent=1 // pred_fallthru
      _
    // Predicated region
    $region22: #{tpu_custom_call.1} parent=1 // pred_check
      _
    $region23: #{tpu_custom_call.1} parent=1 // pred_check_branch
      %343 = sbr.rel (0) target = $region25
    $region24: #{tpu_custom_call.1} parent=1 // pred_region
      %344 = dma.done [#allocation4], 512
    $region25: #{tpu_custom_call.1} parent=1 // pred_fallthru
      _
    %345 = vsyncpa [#allocation3], 1
    %346 = vsyncpa [#allocation6], 1
    %347 = vsyncpa [#allocation4], 1

</llo_original>
